<compile_context>
chip_gen: v5e
topology: v5e:2x2
jax: 0.10.0
libtpu: 0.0.40
codegen_flags: <defaults>
</compile_context>

<pallas_src>
import functools

import jax
import jax.numpy as jnp
from jax import lax
from jax.experimental import pallas as pl
from jax.experimental.pallas import tpu as pltpu


def _round_up(x: int, m: int) -> int:
    return ((x + m - 1) // m) * m


def _ece_kernel(logits_ref, labels_ref, lowers_ref, uppers_ref,
                sum_conf_ref, sum_acc_ref, *,
                n_total: int, block_n: int, blocks_per_core: int):
    step = pl.program_id(1)

    @pl.when(step == 0)
    def _init():
        sum_conf_ref[...] = jnp.zeros_like(sum_conf_ref)
        sum_acc_ref[...] = jnp.zeros_like(sum_acc_ref)

    logits = logits_ref[...].astype(jnp.float32)              # (TN, C)
    tn, c = logits.shape

    # Global (unclamped) block id: the index_map clamps the DMA to the last
    # in-range block, so no OOB read happens, and the row mask below zeroes
    # every row >= n_total (handles both partial and fully-out-of-range tiles).
    blk = pl.program_id(0) * blocks_per_core + step
    row = blk * block_n + lax.broadcasted_iota(jnp.int32, (tn, 1), 0)
    valid = row < n_total                                      # (TN, 1) bool

    # confidence = max softmax prob = 1 / sum(exp(logits - max)); probs never built.
    m = jnp.max(logits, axis=1, keepdims=True)                 # (TN, 1)
    sum_e = jnp.sum(jnp.exp(logits - m), axis=1, keepdims=True)
    # Exact reciprocal (bin edges are exact-compare sensitive); masked rows get
    # conf = -1 which lands in no bin and keeps NaN/Inf garbage out of the sums.
    conf = jnp.where(valid, 1.0 / sum_e, -1.0)                 # (TN, 1)

    # prediction = first argmax of the logits (== argmax of softmax).
    col = lax.broadcasted_iota(jnp.int32, (tn, c), 1)          # (TN, C)
    pred = jnp.min(jnp.where(logits == m, col, c), axis=1, keepdims=True)
    acc = (pred == labels_ref[...]).astype(jnp.float32)        # (TN, 1)

    lowers = lowers_ref[...]                                   # (1, BPAD)
    uppers = uppers_ref[...]                                   # (1, BPAD)
    in_bin = jnp.logical_and(conf > lowers, conf <= uppers).astype(jnp.float32)  # (TN, BPAD)

    # Per-core partial bin sums accumulated directly into the resident output
    # blocks (one (1, BPAD) block per parallel grid index).
    sum_conf_ref[...] += jnp.sum(conf * in_bin, axis=0, keepdims=True)
    sum_acc_ref[...] += jnp.sum(acc * in_bin, axis=0, keepdims=True)


def ece_pallas(logits, labels, n_bins: int = 15, block_n: int = 1024,
               num_parallel: int = 2):
    """logits: (N, C) float (any dtype), labels: (N,) int -> ece: (1,) float32."""
    N, C = logits.shape
    itemsize = jnp.dtype(logits.dtype).itemsize

    # Sublane packing of the native input dtype: 8 rows f32, 16 bf16, 32 int8/fp8.
    sublane = max(8, 32 // max(itemsize, 1))

    # Bin boundaries, lane-padded to a multiple of 128. Padded bins use
    # boundaries > 1 so no confidence (<= 1) ever falls in them.
    bin_pad = _round_up(max(n_bins, 1), 128)
    boundaries = jnp.linspace(0.0, 1.0, n_bins + 1, dtype=jnp.float32)
    lowers = jnp.full((bin_pad,), 2.0, jnp.float32).at[:n_bins].set(
        boundaries[:-1]).reshape(1, bin_pad)
    uppers = jnp.full((bin_pad,), 3.0, jnp.float32).at[:n_bins].set(
        boundaries[1:]).reshape(1, bin_pad)

    # VMEM-budget-aware tile rows: 2x double-buffered native-dtype input tile
    # + ~4 (tn, C) f32 in-kernel temporaries + the (tn, BPAD) bin mask must fit
    # in ~24 MiB (comfortable on every generation once the limit is raised).
    vmem_tile_budget = 24 * 1024 * 1024
    bytes_per_row = 2 * C * itemsize + 4 * C * 4 + 2 * bin_pad * 4 + 64
    budget_rows = max(sublane, vmem_tile_budget // bytes_per_row)

    tn = min(_round_up(block_n, sublane),
             _round_up(N, sublane),
             _round_up(budget_rows, sublane))
    num_blocks = pl.cdiv(N, tn)

    # Split the batch stream across (up to) 2 TensorCores (v7x megacore). On
    # 1-TC chips (v5e/v6e) the parallel axis just runs serially — near-free.
    num_par = max(1, min(num_parallel, num_blocks))
    blocks_per_core = pl.cdiv(num_blocks, num_par)

    labels_col = labels.astype(jnp.int32).reshape(N, 1)

    def _blk_idx(core, i):
        # Clamp so the over-hanging block of the last core never DMAs OOB; its
        # rows are masked to zero contribution inside the kernel.
        return jnp.minimum(core * blocks_per_core + i, num_blocks - 1)

    kernel = functools.partial(_ece_kernel, n_total=N, block_n=tn,
                               blocks_per_core=blocks_per_core)

    cost = pl.CostEstimate(
        flops=8 * N * C,
        transcendentals=N * C,
        bytes_accessed=N * C * itemsize + N * 4 + 2 * num_par * bin_pad * 4,
    )

    sum_conf, sum_acc = pl.pallas_call(
        kernel,
        out_shape=(jax.ShapeDtypeStruct((num_par, bin_pad), jnp.float32),
                   jax.ShapeDtypeStruct((num_par, bin_pad), jnp.float32)),
        grid_spec=pltpu.PrefetchScalarGridSpec(
            num_scalar_prefetch=0,
            grid=(num_par, blocks_per_core),
            in_specs=[
                pl.BlockSpec((tn, C), lambda c, i: (_blk_idx(c, i), 0)),      # logits
                pl.BlockSpec((tn, 1), lambda c, i: (_blk_idx(c, i), 0)),      # labels
                pl.BlockSpec((1, bin_pad), lambda c, i: (0, 0)),              # bin lowers
                pl.BlockSpec((1, bin_pad), lambda c, i: (0, 0)),              # bin uppers
            ],
            out_specs=[
                pl.BlockSpec((1, bin_pad), lambda c, i: (c, 0)),  # per-core sum(conf)
                pl.BlockSpec((1, bin_pad), lambda c, i: (c, 0)),  # per-core sum(acc)
            ],
        ),
        compiler_params=pltpu.CompilerParams(
            dimension_semantics=("parallel", "arbitrary"),
            vmem_limit_bytes=40 * 1024 * 1024,
        ),
        cost_estimate=cost,
    )(logits, labels_col, lowers, uppers)          # native dtype, no wrapper cast

    # Tiny epilogue: |avg_conf - avg_acc| * prop_in_bin == |sum_conf - sum_acc| / N.
    # Padded bins and empty bins have both sums == 0 -> contribute 0, matching
    # the reference's prop_in_bin > 0 gate.
    total_conf = jnp.sum(sum_conf, axis=0)
    total_acc = jnp.sum(sum_acc, axis=0)
    ece = jnp.sum(jnp.abs(total_conf - total_acc)) * (1.0 / N)
    return ece.reshape(1)


def _ece_reference(logits, labels, n_bins: int = 15):
    """Pure-JAX reference matching the PyTorch module."""
    probs = jax.nn.softmax(logits.astype(jnp.float32), axis=1)
    conf = jnp.max(probs, axis=1)
    pred = jnp.argmax(probs, axis=1)
    acc = (pred == labels).astype(jnp.float32)
    boundaries = jnp.linspace(0.0, 1.0, n_bins + 1, dtype=jnp.float32)
    ece = jnp.zeros((1,), jnp.float32)
    for lo, hi in zip(boundaries[:-1], boundaries[1:]):
        in_bin = (conf > lo) & (conf <= hi)
        cnt = jnp.sum(in_bin.astype(jnp.float32))
        s_conf = jnp.sum(jnp.where(in_bin, conf, 0.0))
        s_acc = jnp.sum(jnp.where(in_bin, acc, 0.0))
        ece = ece + jnp.where(cnt > 0, jnp.abs(s_conf - s_acc) / conf.shape[0], 0.0)
    return ece


if __name__ == "__main__":
    key = jax.random.PRNGKey(0)
    k1, k2, k3, k4, k5, k6 = jax.random.split(key, 6)

    # Test 1: single tile, single core group (N = 8, C = 10), f32.
    N, C = 8, 10
    logits = jax.random.normal(k1, (N, C), dtype=jnp.float32) * 3.0
    labels = jax.random.randint(k2, (N,), 0, C, dtype=jnp.int32)
    out = ece_pallas(logits, labels)
    jax.block_until_ready(out)
    ref = _ece_reference(logits, labels)
    assert out.shape == (1,)
    assert jnp.allclose(out, ref, atol=1e-5), (out, ref)

    # Test 2: 2-way core split with a partial tile and one clamped out-of-range
    # tile (N = 20, block_n = 8 -> 3 blocks over grid (2, 2)).
    N2, C2 = 20, 10
    logits2 = jax.random.normal(k3, (N2, C2), dtype=jnp.float32) * 3.0
    labels2 = jax.random.randint(k4, (N2,), 0, C2, dtype=jnp.int32)
    out2 = ece_pallas(logits2, labels2, block_n=8)
    jax.block_until_ready(out2)
    ref2 = _ece_reference(logits2, labels2)
    assert jnp.allclose(out2, ref2, atol=1e-5), (out2, ref2)

    # Test 3: bf16 logits streamed straight from HBM (16-row sublane packing),
    # partial last tile (N = 24, block_n = 16 -> 2 blocks over grid (2, 1)).
    N3, C3 = 24, 16
    logits3 = (jax.random.normal(k5, (N3, C3), dtype=jnp.float32) * 3.0).astype(jnp.bfloat16)
    labels3 = jax.random.randint(k6, (N3,), 0, C3, dtype=jnp.int32)
    out3 = ece_pallas(logits3, labels3, block_n=16)
    jax.block_until_ready(out3)
    ref3 = _ece_reference(logits3, labels3)
    assert jnp.allclose(out3, ref3, atol=1e-5), (out3, ref3)

    print("KERNEL_OK")
</pallas_src>

<mosaic_0001>
module attributes {stable_mosaic.version = 11 : i64} {
  func.func @_ece_kernel(%arg0: i32, %arg1: i32, %arg2: memref<8x10xf32, #tpu.memory_space<vmem>>, %arg3: memref<8x1xi32, #tpu.memory_space<vmem>>, %arg4: memref<1x128xf32, #tpu.memory_space<vmem>>, %arg5: memref<1x128xf32, #tpu.memory_space<vmem>>, %arg6: memref<1x128xf32, #tpu.memory_space<vmem>>, %arg7: memref<1x128xf32, #tpu.memory_space<vmem>>) attributes {dimension_semantics = [#tpu.dimension_semantics<parallel>, #tpu.dimension_semantics<arbitrary>], iteration_bounds = array<i64: 1, 1>, scalar_prefetch = 0 : i64, scratch_operands = 0 : i64, tpu.core_type = #tpu.core_type<tc>, window_params = [{transform_indices = @transform_0, window_bounds = array<i64: 8, 10>}, {transform_indices = @transform_1, window_bounds = array<i64: 8, 1>}, {pipeline_mode = #tpu.pipeline_mode<synchronous>, transform_indices = @transform_2, window_bounds = array<i64: 1, 128>}, {pipeline_mode = #tpu.pipeline_mode<synchronous>, transform_indices = @transform_3, window_bounds = array<i64: 1, 128>}, {transform_indices = @transform_4, window_bounds = array<i64: 1, 128>}, {transform_indices = @transform_5, window_bounds = array<i64: 1, 128>}]} {
    %c0_i32 = arith.constant 0 : i32
    %0 = arith.cmpi eq, %arg1, %c0_i32 : i32
    %1 = arith.extui %0 : i1 to i32
    %c0_i32_0 = arith.constant 0 : i32
    %2 = arith.cmpi ne, %1, %c0_i32_0 : i32
    scf.if %2 {
      %cst_23 = arith.constant 0.000000e+00 : f32
      %59 = vector.broadcast %cst_23 : f32 to vector<1x128xf32>
      %c0_24 = arith.constant 0 : index
      %c0_25 = arith.constant 0 : index
      %60 = vector.load %arg6[%c0_24, %c0_25] : memref<1x128xf32, #tpu.memory_space<vmem>>, vector<1x128xf32>
      tpu.vector_store %arg6[%c0_24, %c0_25], %59 {strides = array<i32>} : memref<1x128xf32, #tpu.memory_space<vmem>>, vector<1x128xf32>,
      %cst_26 = arith.constant 0.000000e+00 : f32
      %61 = vector.broadcast %cst_26 : f32 to vector<1x128xf32>
      %c0_27 = arith.constant 0 : index
      %c0_28 = arith.constant 0 : index
      %62 = vector.load %arg7[%c0_27, %c0_28] : memref<1x128xf32, #tpu.memory_space<vmem>>, vector<1x128xf32>
      tpu.vector_store %arg7[%c0_27, %c0_28], %61 {strides = array<i32>} : memref<1x128xf32, #tpu.memory_space<vmem>>, vector<1x128xf32>,
    } else {
    }
    %c0 = arith.constant 0 : index
    %c0_1 = arith.constant 0 : index
    %3 = vector.load %arg2[%c0, %c0_1] : memref<8x10xf32, #tpu.memory_space<vmem>>, vector<8x10xf32>
    %c1_i32 = arith.constant 1 : i32
    %4 = arith.muli %arg0, %c1_i32 : i32
    %5 = arith.addi %4, %arg1 : i32
    %c8_i32 = arith.constant 8 : i32
    %6 = arith.muli %5, %c8_i32 : i32
    %7 = tpu.iota {dimensions = array<i32: 0>} : vector<8x1xi32>
    %8 = vector.broadcast %6 : i32 to vector<8x1xi32>
    %9 = arith.addi %8, %7 : vector<8x1xi32>
    %c8_i32_2 = arith.constant 8 : i32
    %10 = vector.broadcast %c8_i32_2 : i32 to vector<8x1xi32>
    %11 = arith.cmpi slt, %9, %10 : vector<8x1xi32>
    %cst = arith.constant dense<0xFF800000> : vector<8xf32>
    %12 = vector.multi_reduction <maximumf>, %3, %cst [1] : vector<8x10xf32> to vector<8xf32>
    %13 = vector.shape_cast %12 : vector<8xf32> to vector<8x1xf32>
    %14 = vector.broadcast %13 : vector<8x1xf32> to vector<8x10xf32>
    %15 = arith.subf %3, %14 : vector<8x10xf32>
    %16 = math.exp %15 : vector<8x10xf32>
    %cst_3 = arith.constant dense<0.000000e+00> : vector<8xf32>
    %17 = vector.multi_reduction <add>, %16, %cst_3 [1] : vector<8x10xf32> to vector<8xf32>
    %18 = vector.shape_cast %17 : vector<8xf32> to vector<8x1xf32>
    %cst_4 = arith.constant 1.000000e+00 : f32
    %19 = vector.broadcast %cst_4 : f32 to vector<8x1xf32>
    %20 = arith.divf %19, %18 : vector<8x1xf32>
    %cst_5 = arith.constant -1.000000e+00 : f32
    %21 = vector.broadcast %cst_5 : f32 to vector<8x1xf32>
    %22 = arith.select %11, %20, %21 : vector<8x1xi1>, vector<8x1xf32>
    %23 = tpu.iota {dimensions = array<i32: 1>} : vector<8x10xi32>
    %24 = vector.broadcast %13 : vector<8x1xf32> to vector<8x10xf32>
    %25 = arith.cmpf oeq, %3, %24 : vector<8x10xf32>
    %c10_i32 = arith.constant 10 : i32
    %26 = vector.broadcast %c10_i32 : i32 to vector<8x10xi32>
    %27 = arith.select %25, %23, %26 : vector<8x10xi1>, vector<8x10xi32>
    %cst_6 = arith.constant dense<2147483647> : vector<8xi32>
    %28 = vector.multi_reduction <minsi>, %27, %cst_6 [1] : vector<8x10xi32> to vector<8xi32>
    %29 = vector.shape_cast %28 : vector<8xi32> to vector<8x1xi32>
    %c0_7 = arith.constant 0 : index
    %c0_8 = arith.constant 0 : index
    %30 = vector.load %arg3[%c0_7, %c0_8] : memref<8x1xi32, #tpu.memory_space<vmem>>, vector<8x1xi32>
    %31 = arith.cmpi eq, %29, %30 : vector<8x1xi32>
    %32 = arith.extui %31 : vector<8x1xi1> to vector<8x1xi32>
    %33 = arith.sitofp %32 : vector<8x1xi32> to vector<8x1xf32>
    %c0_9 = arith.constant 0 : index
    %c0_10 = arith.constant 0 : index
    %34 = vector.load %arg4[%c0_9, %c0_10] : memref<1x128xf32, #tpu.memory_space<vmem>>, vector<1x128xf32>
    %c0_11 = arith.constant 0 : index
    %c0_12 = arith.constant 0 : index
    %35 = vector.load %arg5[%c0_11, %c0_12] : memref<1x128xf32, #tpu.memory_space<vmem>>, vector<1x128xf32>
    %36 = vector.broadcast %22 : vector<8x1xf32> to vector<8x128xf32>
    %37 = vector.broadcast %34 : vector<1x128xf32> to vector<8x128xf32>
    %38 = arith.cmpf ogt, %36, %37 : vector<8x128xf32>
    %39 = vector.broadcast %22 : vector<8x1xf32> to vector<8x128xf32>
    %40 = vector.broadcast %35 : vector<1x128xf32> to vector<8x128xf32>
    %41 = arith.cmpf ole, %39, %40 : vector<8x128xf32>
    %42 = arith.andi %38, %41 : vector<8x128xi1>
    %43 = arith.extui %42 : vector<8x128xi1> to vector<8x128xi32>
    %44 = arith.sitofp %43 : vector<8x128xi32> to vector<8x128xf32>
    %c0_13 = arith.constant 0 : index
    %c0_14 = arith.constant 0 : index
    %45 = vector.load %arg6[%c0_13, %c0_14] : memref<1x128xf32, #tpu.memory_space<vmem>>, vector<1x128xf32>
    %46 = vector.broadcast %22 : vector<8x1xf32> to vector<8x128xf32>
    %47 = arith.mulf %46, %44 : vector<8x128xf32>
    %cst_15 = arith.constant dense<0.000000e+00> : vector<128xf32>
    %48 = vector.multi_reduction <add>, %47, %cst_15 [0] : vector<8x128xf32> to vector<128xf32>
    %49 = vector.shape_cast %48 : vector<128xf32> to vector<1x128xf32>
    %50 = arith.addf %45, %49 : vector<1x128xf32>
    %c0_16 = arith.constant 0 : index
    %c0_17 = arith.constant 0 : index
    %51 = vector.load %arg6[%c0_16, %c0_17] : memref<1x128xf32, #tpu.memory_space<vmem>>, vector<1x128xf32>
    tpu.vector_store %arg6[%c0_16, %c0_17], %50 {strides = array<i32>} : memref<1x128xf32, #tpu.memory_space<vmem>>, vector<1x128xf32>,
    %c0_18 = arith.constant 0 : index
    %c0_19 = arith.constant 0 : index
    %52 = vector.load %arg7[%c0_18, %c0_19] : memref<1x128xf32, #tpu.memory_space<vmem>>, vector<1x128xf32>
    %53 = vector.broadcast %33 : vector<8x1xf32> to vector<8x128xf32>
    %54 = arith.mulf %53, %44 : vector<8x128xf32>
    %cst_20 = arith.constant dense<0.000000e+00> : vector<128xf32>
    %55 = vector.multi_reduction <add>, %54, %cst_20 [0] : vector<8x128xf32> to vector<128xf32>
    %56 = vector.shape_cast %55 : vector<128xf32> to vector<1x128xf32>
    %57 = arith.addf %52, %56 : vector<1x128xf32>
    %c0_21 = arith.constant 0 : index
    %c0_22 = arith.constant 0 : index
    %58 = vector.load %arg7[%c0_21, %c0_22] : memref<1x128xf32, #tpu.memory_space<vmem>>, vector<1x128xf32>
    tpu.vector_store %arg7[%c0_21, %c0_22], %57 {strides = array<i32>} : memref<1x128xf32, #tpu.memory_space<vmem>>, vector<1x128xf32>,
    return
  }
  func.func @transform_0(%arg0: i32, %arg1: i32) -> (i32, i32) {
    %c1_i32 = arith.constant 1 : i32
    %0 = arith.muli %arg0, %c1_i32 : i32
    %1 = arith.addi %0, %arg1 : i32
    %c0_i32 = arith.constant 0 : i32
    %2 = arith.minsi %1, %c0_i32 : i32
    %c0_i32_0 = arith.constant 0 : i32
    %c0_i32_1 = arith.constant 0 : i32
    return %2, %c0_i32_0 : i32, i32
  }
  func.func @transform_1(%arg0: i32, %arg1: i32) -> (i32, i32) {
    %c1_i32 = arith.constant 1 : i32
    %0 = arith.muli %arg0, %c1_i32 : i32
    %1 = arith.addi %0, %arg1 : i32
    %c0_i32 = arith.constant 0 : i32
    %2 = arith.minsi %1, %c0_i32 : i32
    %c0_i32_0 = arith.constant 0 : i32
    %c0_i32_1 = arith.constant 0 : i32
    return %2, %c0_i32_0 : i32, i32
  }
  func.func @transform_2(%arg0: i32, %arg1: i32) -> (i32, i32) {
    %c0_i32 = arith.constant 0 : i32
    %c0_i32_0 = arith.constant 0 : i32
    %c0_i32_1 = arith.constant 0 : i32
    return %c0_i32, %c0_i32_0 : i32, i32
  }
  func.func @transform_3(%arg0: i32, %arg1: i32) -> (i32, i32) {
    %c0_i32 = arith.constant 0 : i32
    %c0_i32_0 = arith.constant 0 : i32
    %c0_i32_1 = arith.constant 0 : i32
    return %c0_i32, %c0_i32_0 : i32, i32
  }
  func.func @transform_4(%arg0: i32, %arg1: i32) -> (i32, i32) {
    %c0_i32 = arith.constant 0 : i32
    %c0_i32_0 = arith.constant 0 : i32
    return %arg0, %c0_i32 : i32, i32
  }
  func.func @transform_5(%arg0: i32, %arg1: i32) -> (i32, i32) {
    %c0_i32 = arith.constant 0 : i32
    %c0_i32_0 = arith.constant 0 : i32
    return %arg0, %c0_i32 : i32, i32
  }
}

</mosaic_0001>

<llo_original>
// kernel: tpu_custom_call.1
$region0: #{tpu_custom_call.1}
  #allocation0 [shape = 'u32[]', space=smem, size = 0x4, offset = 0x4, fixed_abs, tag = 'smem constant byte address 0x4 - core index']
  #allocation1 [shape = 'u32[72,128]{1,0:T(1,128)}', space=vmem, size = 0x9000, scoped, tag = 'internal scratch']
  %s0 = inlined_call_operand.vmem [shape: f32[8,10], index: 0, kind: input, shape index: {}]
  %s1 = inlined_call_operand.vmem [shape: s32[8,1], index: 1, kind: input, shape index: {}]
  %s2 = inlined_call_operand.vmem [shape: f32[1,128], index: 2, kind: input, shape index: {}]
  %s3 = inlined_call_operand.vmem [shape: f32[1,128], index: 3, kind: input, shape index: {}]
  %s4 = inlined_call_operand.hbm [shape: f32[1,128], index: 4, kind: output, shape index: {0}]
  %s5 = inlined_call_operand.hbm [shape: f32[1,128], index: 5, kind: output, shape index: {1}]
  %6 = xla_tuple %s4, %s5
  %s7 = sld [smem:[#allocation0]]
  $region38: #{tpu_custom_call.1} parent=0
    _
  %s9 = ssub.s32 1, %s7
  %s10 = scalar_select 0, %s9, %s7
  $region1: #{tpu_custom_call.1} parent=0
    #allocation2 [shape = 'u8[512]{0}', space=vmem, size = 0x400, scoped, tag = 'output window, operand 0, single buffered']
    #allocation3 [shape = 's32[1]{0}', space=sflag, size = 0x4, scoped, tag = 'scoped memory for tpu_custom_call.1']
    #allocation4 [shape = 'u8[512]{0}', space=vmem, size = 0x400, scoped, tag = 'output window, operand 1, single buffered']
    #allocation5 [shape = 's32[1]{0}', space=sflag, size = 0x4, scoped, tag = 'scoped memory for tpu_custom_call.1']
    %11 = vsyncpa [#allocation3], 0
    %12 = vsyncpa [#allocation5], 0
    // Predicated region
    $region2: #{tpu_custom_call.1} parent=1 // pred_check
      _
    $region3: #{tpu_custom_call.1} parent=1 // pred_check_branch
      %14 = sbr.rel (0) target = $region5
    $region4: #{tpu_custom_call.1} parent=1 // pred_region
      %s15 = sadd.s32 0, 0
      %p16 = scmp.lt.s32.totalorder %s15, 0
      %s17 = scalar_select %p16, %s15, 0
      %p18 = scmp.lt.s32.totalorder %s17, 0
      %s19 = scalar_select %p18, %s17, 0
      %s20 = smul.addr %s19, 8
      %s21 = scalar_lea.vmem %s0, %s20
      %s22 = sadd.s32 0, 0
      %p23 = scmp.lt.s32.totalorder %s22, 0
      %s24 = scalar_select %p23, %s22, 0
    $region5: #{tpu_custom_call.1} parent=1 // pred_fallthru
      _
    // Predicated region
    $region6: #{tpu_custom_call.1} parent=1 // pred_check
      _
    $region7: #{tpu_custom_call.1} parent=1 // pred_check_branch
      %26 = sbr.rel (0) target = $region9
    $region8: #{tpu_custom_call.1} parent=1 // pred_region
      %s27 = sadd.s32 0, 0
      %p28 = scmp.lt.s32.totalorder %s27, 0
      %s29 = scalar_select %p28, %s27, 0
      %p30 = scmp.lt.s32.totalorder %s29, 0
      %s31 = scalar_select %p30, %s29, 0
      %s32 = smul.addr %s31, 8
      %s33 = scalar_lea.vmem %s1, %s32
      %s34 = sadd.s32 0, 0
      %p35 = scmp.lt.s32.totalorder %s34, 0
      %s36 = scalar_select %p35, %s34, 0
    $region9: #{tpu_custom_call.1} parent=1 // pred_fallthru
      _
    // Predicated region
    $region10: #{tpu_custom_call.1} parent=1 // pred_check
      _
    $region11: #{tpu_custom_call.1} parent=1 // pred_check_branch
      %38 = sbr.rel (0) target = $region13
    $region12: #{tpu_custom_call.1} parent=1 // pred_region
      _
    $region13: #{tpu_custom_call.1} parent=1 // pred_fallthru
      _
    // Predicated region
    $region14: #{tpu_custom_call.1} parent=1 // pred_check
      _
    $region15: #{tpu_custom_call.1} parent=1 // pred_check_branch
      %40 = sbr.rel (0) target = $region17
    $region16: #{tpu_custom_call.1} parent=1 // pred_region
      _
    $region17: #{tpu_custom_call.1} parent=1 // pred_fallthru
      _
    %s41 = sadd.s32 0, 0
    %p42 = scmp.lt.s32.totalorder %s41, 0
    %s43 = scalar_select %p42, %s41, 0
    %p44 = scmp.lt.s32.totalorder %s43, 0
    %s45 = scalar_select %p44, %s43, 0
    %s46 = smul.addr %s45, 8
    %s47 = scalar_lea.vmem %s0, %s46
    %s48 = sadd.s32 0, 0
    %p49 = scmp.lt.s32.totalorder %s48, 0
    %s50 = scalar_select %p49, %s48, 0
    %p51 = scmp.lt.s32.totalorder %s50, 0
    %s52 = scalar_select %p51, %s50, 0
    %s53 = smul.addr %s52, 8
    %s54 = scalar_lea.vmem %s1, %s53
    %s55 = sadd.s32 0, 0
    %p56 = scmp.lt.s32.totalorder %s55, 0
    %s57 = scalar_select %p56, %s55, 0
    %p58 = scmp.lt.s32.totalorder %s57, 0
    %s59 = scalar_select %p58, %s57, 0
    %s60 = smul.addr %s59, 8
    %s61 = scalar_lea.vmem %s0, %s60
    %s62 = sadd.s32 0, 0
    %p63 = scmp.lt.s32.totalorder %s62, 0
    %s64 = scalar_select %p63, %s62, 0
    %s65 = sadd.s32 0, 0
    %p66 = scmp.lt.s32.totalorder %s65, 0
    %s67 = scalar_select %p66, %s65, 0
    %p68 = scmp.lt.s32.totalorder %s67, 0
    %s69 = scalar_select %p68, %s67, 0
    %s70 = smul.addr %s69, 8
    %s71 = scalar_lea.vmem %s1, %s70
    %s72 = sadd.s32 0, 0
    %p73 = scmp.lt.s32.totalorder %s72, 0
    %s74 = scalar_select %p73, %s72, 0
    %p75 = scmp.eq.s32.totalorder 0, 0
    // Predicated region
    $region18: #{tpu_custom_call.1} parent=1 // pred_check
      %p76 = pneg %p75
    $region19: #{tpu_custom_call.1} parent=1 // pred_check_branch
      %78 = sbr.rel (%p76) target = $region21
    $region20: #{tpu_custom_call.1} parent=1 // pred_region
      %79 = vst [vmem:[#allocation2] sm:$0x1] 0.0
      %80 = vst [vmem:[#allocation4] sm:$0x1] 0.0
    $region21: #{tpu_custom_call.1} parent=1 // pred_fallthru
      _
    %v81 = vld [vmem:[%s61] sm:$0xff]
    %s82 = sadd.s32 0, 0
    %s83 = smul.u32 %s82, 8
    %v84 = vlaneseq
    %v85 = vshrl.u32 %v84, 7
    %v86 = vstv %s83
    %v87 = vadd.s32 %v86, %v85
    %vm88 = vcmp.lt.s32.totalorder %v87, 8
    %vm89 = vcmask 80896
    %v90 = vsel %vm89, %v81, -inf
    %91 = vmax.xlane.f32.xlu0 %v90
    %v92 = vpop.xlane.xlu0 %91
    %v93 = vsub.f32 %v81, %v92
    %v94 = vmul.f32 %v93, 1.442695
    %v95 = vpow.pop %v94
    %v96 = vsel %vm89, %v95, 0.0
    %97 = vadd.xlane.f32.xlu0 %v96
    %v98 = vpop.xlane.xlu0 %97
    %v99 = vrcp.pop %v98
    %v100 = vmul.f32 %v98, %v99
    %v101 = vsub.f32 1.0, %v100
    %v102 = vmul.f32 %v99, %v101
    %v103 = vadd.f32 %v99, %v102
    %vm104 = vweird.f32 %v98
    %vm105 = vweird.f32 %v99
    %vm106 = vmor %vm104, %vm105
    %v107 = vsel %vm106, %v99, %v103
    %v108 = vand.u32 2147483647, %v98
    %vm109 = vcmp.eq.f32.partialorder %v108, 8.507059e+37
    %v110 = vand.u32 %v98, 2147483648
    %v111 = vor.u32 1.1754944e-38, %v110
    %v112 = vsel %vm109, %v111, %v107
    %v113 = vmul.f32 1.0, %v112
    %v114 = vsel %vm88, %v113, -1.0
    %v115 = vlaneseq
    %v116 = vand.u32 %v115, 127
    %vm117 = vcmp.eq.f32.partialorder %v81, %v92
    %v118 = vsel %vm117, %v116, 10
    %v119 = vsel %vm89, %v118, 2147483647
    %v120 = vand.u32 %v119, 65535
    %v121 = vshra.s32 %v119, 16
    %v122 = vcvt.s32.f32 %v120
    %v123 = vcvt.s32.f32 %v121
    %124 = vmin.xlane.f32.xlu0 %v123
    %v125 = vpop.xlane.xlu0 %124
    %vm126 = vcmp.eq.f32.partialorder %v123, %v125
    %v127 = vsel %vm126, %v122, inf
    %128 = vmin.xlane.f32.xlu0 %v127
    %v129 = vpop.xlane.xlu0 %128
    %v130 = vcvt.f32.s32 %v129
    %v131 = vcvt.f32.s32 %v125
    %v132 = vshll.u32 %v131, 16
    %v133 = vadd.s32 %v132, %v130
    %v134 = vld [vmem:[%s71] sm:$0xff]
    %vm135 = vcmp.eq.s32.totalorder %v133, %v134
    %v136 = vsel %vm135, 1, 0
    %v137 = vcvt.s32.f32 %v136
    %v138 = vld [vmem:[%s2] sm:$0x1]
    %v139 = vld [vmem:[%s3] sm:$0x1]
    %v141 = vperm.slane %v138, 0
    %vm143 = vcmp.gt.f32.partialorder %v114, %v141
    %v145 = vperm.slane %v139, 0
    %vm147 = vcmp.le.f32.partialorder %v114, %v145
    %vm148 = vmand %vm143, %vm147
    %v149 = vsel %vm148, 1, 0
    %v150 = vcvt.s32.f32 %v149
    %v151 = vld [vmem:[#allocation2] sm:$0x1]
    %v152 = vmul.f32 %v114, %v150
    %v153 = vrot.slane %v152, 4
    %v154 = vadd.f32 %v152, %v153
    %v155 = vrot.slane %v154, 2
    %v156 = vadd.f32 %v154, %v155
    %v157 = vrot.slane %v156, 1
    %v158 = vadd.f32 %v156, %v157
    %v159 = vadd.f32 %v151, %v158
    %160 = vst [vmem:[#allocation2] sm:$0x1] %v159
    %v161 = vld [vmem:[#allocation4] sm:$0x1]
    %163 = vset.pattern.permute.xlu0 0
    %164 = vperm.xlu0 %163, %v137
    %v165 = vpop.permute.xlu0 %164
    %v167 = vmul.f32 %v165, %v150
    %v168 = vrot.slane %v167, 4
    %v169 = vadd.f32 %v167, %v168
    %v170 = vrot.slane %v169, 2
    %v171 = vadd.f32 %v169, %v170
    %v172 = vrot.slane %v171, 1
    %v173 = vadd.f32 %v171, %v172
    %v174 = vadd.f32 %v161, %v173
    %175 = vst [vmem:[#allocation4] sm:$0x1] %v174
    // Predicated region
    $region22: #{tpu_custom_call.1} parent=1 // pred_check
      _
    $region23: #{tpu_custom_call.1} parent=1 // pred_check_branch
      %177 = sbr.rel (0) target = $region25
    $region24: #{tpu_custom_call.1} parent=1 // pred_region
      %179 = vsyncadd [#allocation3], 0
      %s181 = sshll.u32 [#allocation2], 4
      %s182 = int_to_ptr.vmem [resolvable:$true] %s181
      %s183 = sshll.u32 %s4, 4
      %s184 = int_to_ptr.hbm [resolvable:$true] %s183
      %186 = dma.vmem_to_hbm [thread:$0]  %s182, 16, %s184, [#allocation3]
    $region25: #{tpu_custom_call.1} parent=1 // pred_fallthru
      _
    // Predicated region
    $region26: #{tpu_custom_call.1} parent=1 // pred_check
      _
    $region27: #{tpu_custom_call.1} parent=1 // pred_check_branch
      %188 = sbr.rel (0) target = $region29
    $region28: #{tpu_custom_call.1} parent=1 // pred_region
      %190 = vsyncadd [#allocation5], 0
      %s192 = sshll.u32 [#allocation4], 4
      %s193 = int_to_ptr.vmem [resolvable:$true] %s192
      %s194 = sshll.u32 %s5, 4
      %s195 = int_to_ptr.hbm [resolvable:$true] %s194
      %197 = dma.vmem_to_hbm [thread:$0]  %s193, 16, %s195, [#allocation5]
    $region29: #{tpu_custom_call.1} parent=1 // pred_fallthru
      _
    // Predicated region
    $region30: #{tpu_custom_call.1} parent=1 // pred_check
      _
    $region31: #{tpu_custom_call.1} parent=1 // pred_check_branch
      %199 = sbr.rel (0) target = $region33
    $region32: #{tpu_custom_call.1} parent=1 // pred_region
      %201 = dma.done [#allocation3], 16
    $region33: #{tpu_custom_call.1} parent=1 // pred_fallthru
      _
    // Predicated region
    $region34: #{tpu_custom_call.1} parent=1 // pred_check
      _
    $region35: #{tpu_custom_call.1} parent=1 // pred_check_branch
      %203 = sbr.rel (0) target = $region37
    $region36: #{tpu_custom_call.1} parent=1 // pred_region
      %205 = dma.done [#allocation5], 16
    $region37: #{tpu_custom_call.1} parent=1 // pred_fallthru
      _
    %206 = vsyncpa [#allocation3], 1
    %207 = vsyncpa [#allocation5], 1

</llo_original>
